<compile_context>
chip_gen: v7x
topology: tpu7x:2x2x1
jax: 0.10.0
libtpu: 0.0.40
codegen_flags: <defaults>
</compile_context>

<pallas_src>
from functools import partial
from math import sqrt

import jax
import jax.numpy as jnp
from jax.experimental import pallas as pl
from jax.experimental.pallas import tpu as pltpu

_DEFAULT_SCALE = 1.4142135623730951        # sqrt(2): module default divisor
_LANE_CANDIDATES = (1024, 512, 256, 128)   # prefer wide, lane-dense last dim
_TARGET_BLOCK_BYTES = 4 * 1024 * 1024      # ~4 MiB per block buffer
_PIPELINE_MIN_BYTES = 512 * 1024           # above this, force a multi-step grid
_MIN_GRID_STEPS = 8                        # pipeline-depth target for big inputs
_MIN_PALLAS_ELEMS = 8 * 128                # below one minimal tile -> plain JAX
_VMEM_LIMIT_BYTES = 40 * 1024 * 1024       # explicit scoped-VMEM guard (all gens)

# tanh-form erf approximation: erf(z) ~= tanh(C1*z + C3*z^3)   (opt-in only)
_ERF_TANH_C1 = 1.1283791670955126          # 2 / sqrt(pi)
_ERF_TANH_C3 = 0.1009110972795813


def _gelu_math(x, inv_scale, approximate=False):
    """GeLU math; f32 accumulation, cast back to the input dtype."""
    xf = x.astype(jnp.float32)
    z = xf * inv_scale
    if approximate:
        erf_z = jnp.tanh(z * (_ERF_TANH_C1 + _ERF_TANH_C3 * z * z))
    else:
        erf_z = jax.lax.erf(z)
    return (xf * 0.5 * (1.0 + erf_z)).astype(x.dtype)


def _gelu_kernel(x_ref, o_ref, *, inv_scale, approximate):
    o_ref[...] = _gelu_math(x_ref[...], inv_scale, approximate)


def _pick_lane(n_bulk: int) -> int:
    for cand in _LANE_CANDIDATES:
        if n_bulk % cand == 0:
            return cand
    return 128   # unreachable: n_bulk is a multiple of 128 by construction


def _pick_tile_rows(rows: int, lane: int, itemsize: int) -> int:
    """Block rows: ~4 MiB blocks, but >= 8 grid steps once the tensor is big."""
    max_rows = max(16, (_TARGET_BLOCK_BYTES // (lane * itemsize)) // 16 * 16)
    total_bytes = rows * lane * itemsize
    min_steps = _MIN_GRID_STEPS if total_bytes >= _PIPELINE_MIN_BYTES else 1
    per_step = -(-rows // min_steps)                  # cdiv
    per_step = ((per_step + 15) // 16) * 16           # (8,128)-legal, f32 & bf16
    tile_rows = max(16, min(max_rows, per_step))
    if tile_rows >= rows:
        tile_rows = rows                              # single full block (legal)
    return tile_rows


def gelu_pallas(x: jax.Array, tanh: float | None = None, *,
                approximate: bool = False) -> jax.Array:
    """Elementwise GeLU matching the PyTorch module's forward semantics.

    divisor = sqrt(tanh) if tanh is given else sqrt(2).  Any float shape/dtype;
    the contiguous flat view is processed as a lane-dense 2D slab by Pallas and
    a <128-element tail (if any) by plain jnp.
    """
    scale = sqrt(tanh) if tanh is not None else _DEFAULT_SCALE
    inv_scale = 1.0 / scale

    orig_shape = x.shape
    n = x.size
    n_bulk = (n // 128) * 128           # 128-aligned prefix handled by Pallas

    # Tiny tensors: pallas_call launch + layout plumbing >> compute.
    if n_bulk < _MIN_PALLAS_ELEMS:
        return _gelu_math(x, inv_scale, approximate)

    x_flat = x.reshape(-1)              # free for contiguous inputs
    x_bulk = x_flat[:n_bulk] if n_bulk != n else x_flat

    lane = _pick_lane(n_bulk)
    rows = n_bulk // lane
    itemsize = jnp.dtype(x.dtype).itemsize
    tile_rows = _pick_tile_rows(rows, lane, itemsize)
    grid = (pl.cdiv(rows, tile_rows),)

    x2d = x_bulk.reshape(rows, lane)

    out2d = pl.pallas_call(
        partial(_gelu_kernel, inv_scale=inv_scale, approximate=approximate),
        out_shape=jax.ShapeDtypeStruct((rows, lane), x.dtype),
        grid_spec=pltpu.PrefetchScalarGridSpec(
            num_scalar_prefetch=0,
            grid=grid,
            in_specs=[pl.BlockSpec((tile_rows, lane), lambda i: (i, 0))],
            out_specs=pl.BlockSpec((tile_rows, lane), lambda i: (i, 0)),
        ),
        compiler_params=pltpu.CompilerParams(
            dimension_semantics=("parallel",),
            vmem_limit_bytes=_VMEM_LIMIT_BYTES,
        ),
    )(x2d)

    out_bulk = out2d.reshape(-1)
    if n_bulk != n:
        # <128-element tail: plain jnp, stitched on (no full-tensor pad pass).
        out_tail = _gelu_math(x_flat[n_bulk:], inv_scale, approximate)
        return jnp.concatenate([out_bulk, out_tail]).reshape(orig_shape)
    return out_bulk.reshape(orig_shape)


if __name__ == "__main__":
    key = jax.random.PRNGKey(0)
    k0, k1, k2 = jax.random.split(key, 3)

    def ref_gelu(x, divisor=_DEFAULT_SCALE):
        xf = x.astype(jnp.float32)
        return (xf * 0.5 * (1.0 + jax.lax.erf(xf / divisor))).astype(x.dtype)

    # NCHW input, consistent with the CNN module this activation lives in.
    x = jax.random.normal(k0, (2, 4, 16, 16), dtype=jnp.float32)
    out = jax.block_until_ready(gelu_pallas(x))
    assert jnp.allclose(out, ref_gelu(x), atol=1e-5, rtol=1e-5), "mismatch"

    # Optional tanh arg: module stores sqrt(tanh) and divides by it.
    out2 = jax.block_until_ready(gelu_pallas(x, tanh=3.0))
    assert jnp.allclose(out2, ref_gelu(x, sqrt(3.0)), atol=1e-5, rtol=1e-5), \
        "mismatch (tanh=3)"

    # Misaligned element count: Pallas bulk + jnp tail (no pad/slice passes).
    x3 = jax.random.normal(k1, (3, 5, 7, 11), dtype=jnp.float32)
    out3 = jax.block_until_ready(gelu_pallas(x3))
    assert jnp.allclose(out3, ref_gelu(x3), atol=1e-5, rtol=1e-5), \
        "mismatch (misaligned)"

    # Larger tensor: exercises the multi-step, software-pipelined grid path.
    x4 = jax.random.normal(k2, (8, 16, 64, 64), dtype=jnp.float32)
    out4 = jax.block_until_ready(gelu_pallas(x4))
    assert jnp.allclose(out4, ref_gelu(x4), atol=1e-5, rtol=1e-5), \
        "mismatch (pipelined)"

    # bf16 path: f32 math inside the kernel, cast back on store.
    xb = x.astype(jnp.bfloat16)
    outb = jax.block_until_ready(gelu_pallas(xb))
    refb = ref_gelu(xb)
    assert jnp.allclose(outb.astype(jnp.float32), refb.astype(jnp.float32),
                        atol=1e-2, rtol=1e-2), "mismatch (bf16)"

    # Opt-in tanh-form erf (EUP path); deviates slightly from exact erf.
    outa = jax.block_until_ready(gelu_pallas(x, approximate=True))
    assert jnp.allclose(outa, ref_gelu(x), atol=2e-2, rtol=2e-2), \
        "mismatch (approximate)"

    print("KERNEL_OK")
</pallas_src>

<mosaic_0001>
module attributes {stable_mosaic.version = 11 : i64} {
  func.func @_gelu_kernel(%arg0: i32, %arg1: memref<2x1024xf32, #tpu.memory_space<vmem>>, %arg2: memref<2x1024xf32, #tpu.memory_space<vmem>>) attributes {dimension_semantics = [#tpu.dimension_semantics<parallel>], iteration_bounds = array<i64: 1>, scalar_prefetch = 0 : i64, scratch_operands = 0 : i64, tpu.core_type = #tpu.core_type<tc>, window_params = [{transform_indices = @transform_0, window_bounds = array<i64: 2, 1024>}, {transform_indices = @transform_1, window_bounds = array<i64: 2, 1024>}]} {
    %c0 = arith.constant 0 : index
    %c0_0 = arith.constant 0 : index
    %0 = vector.load %arg1[%c0, %c0_0] : memref<2x1024xf32, #tpu.memory_space<vmem>>, vector<2x1024xf32>
    %cst = arith.constant 0.707106769 : f32
    %1 = vector.broadcast %cst : f32 to vector<2x1024xf32>
    %2 = arith.mulf %0, %1 : vector<2x1024xf32>
    %3 = math.erf %2 : vector<2x1024xf32>
    %cst_1 = arith.constant 5.000000e-01 : f32
    %4 = vector.broadcast %cst_1 : f32 to vector<2x1024xf32>
    %5 = arith.mulf %0, %4 : vector<2x1024xf32>
    %cst_2 = arith.constant 1.000000e+00 : f32
    %6 = vector.broadcast %cst_2 : f32 to vector<2x1024xf32>
    %7 = arith.addf %6, %3 : vector<2x1024xf32>
    %8 = arith.mulf %5, %7 : vector<2x1024xf32>
    %c0_3 = arith.constant 0 : index
    %c0_4 = arith.constant 0 : index
    %9 = vector.load %arg2[%c0_3, %c0_4] : memref<2x1024xf32, #tpu.memory_space<vmem>>, vector<2x1024xf32>
    tpu.vector_store %arg2[%c0_3, %c0_4], %8 {strides = array<i32>} : memref<2x1024xf32, #tpu.memory_space<vmem>>, vector<2x1024xf32>,
    return
  }
  func.func @transform_0(%arg0: i32) -> (i32, i32) {
    %c0_i32 = arith.constant 0 : i32
    %c0_i32_0 = arith.constant 0 : i32
    return %arg0, %c0_i32 : i32, i32
  }
  func.func @transform_1(%arg0: i32) -> (i32, i32) {
    %c0_i32 = arith.constant 0 : i32
    %c0_i32_0 = arith.constant 0 : i32
    return %arg0, %c0_i32 : i32, i32
  }
}

</mosaic_0001>

<llo_original>
// kernel: tpu_custom_call.1
$region0: #{tpu_custom_call.1}
  #allocation0 [shape = 'u32[]', space=smem, size = 0x4, offset = 0x4, fixed_abs, tag = 'smem constant byte address 0x4 - core index']
  #allocation1 [shape = 'u32[144,128]{1,0:T(1,128)}', space=vmem, size = 0x12000, scoped, tag = 'internal scratch']
  %s0 = inlined_call_operand.hbm [shape: f32[2,1024], index: 0, kind: input, shape index: {}]
  %s1 = inlined_call_operand.hbm [shape: f32[2,1024], index: 1, kind: output, shape index: {}]
  %s2 = sld [smem:[#allocation0]]
  $region18: #{tpu_custom_call.1} parent=0
    _
  %s4 = ssub.s32 1, %s2
  %s5 = scalar_select 0, %s4, %s2
  $region1: #{tpu_custom_call.1} parent=0
    #allocation2 [shape = 'u8[8192]{0}', space=vmem, size = 0x2000, scoped, tag = 'input window, operand 0, single buffered']
    #allocation3 [shape = 's32[1]{0}', space=sflag, size = 0x4, scoped, tag = 'scoped memory for tpu_custom_call.1']
    #allocation4 [shape = 's32[1]{0}', space=sflag, size = 0x4, scoped, tag = 'scoped memory for tpu_custom_call.1']
    #allocation5 [shape = 'u8[8192]{0}', space=vmem, size = 0x2000, scoped, tag = 'output window, operand 0, single buffered']
    %6 = vsyncpa [#allocation3], 0
    %7 = vsyncpa [#allocation4], 0
    // Predicated region
    $region2: #{tpu_custom_call.1} parent=1 // pred_check
      _
    $region3: #{tpu_custom_call.1} parent=1 // pred_check_branch
      %9 = sbr.rel (0) target = $region5
    $region4: #{tpu_custom_call.1} parent=1 // pred_region
      %s11 = ssub.s32 256, 256
      %12 = vsyncadd [#allocation3], %s11
      %s14 = sshll.u32 [#allocation2], 4
      %s15 = int_to_ptr.vmem [resolvable:$true] %s14
      %17 = dma.hbm_to_vmem [thread:$0]  %s0, 256, %s15, [#allocation3]
    $region5: #{tpu_custom_call.1} parent=1 // pred_fallthru
      _
    // Predicated region
    $region6: #{tpu_custom_call.1} parent=1 // pred_check
      _
    $region7: #{tpu_custom_call.1} parent=1 // pred_check_branch
      %19 = sbr.rel (0) target = $region9
    $region8: #{tpu_custom_call.1} parent=1 // pred_region
      %20 = dma.done [#allocation3], 256
    $region9: #{tpu_custom_call.1} parent=1 // pred_fallthru
      _
    %v21 = vld [vmem:[#allocation2] sm:$0xff]
    %v22 = vld [vmem:[#allocation2 + $0x8] sm:$0xff]
    %v23 = vmul.f32 %v21, 0.70710677
    %v24 = vmul.f32 %v22, 0.70710677
    %v25 = verf.f32.pop %v23
    %v26 = verf.f32.pop %v24
    %v27 = vmul.f32 %v21, 0.5
    %v28 = vmul.f32 %v22, 0.5
    %v29 = vadd.f32 %v25, 1.0
    %v30 = vadd.f32 %v26, 1.0
    %v31 = vmul.f32 %v27, %v29
    %v32 = vmul.f32 %v28, %v30
    %33 = vst [vmem:[#allocation5] sm:$0xff] %v31
    %34 = vst [vmem:[#allocation5 + $0x8] sm:$0xff] %v32
    // Predicated region
    $region10: #{tpu_custom_call.1} parent=1 // pred_check
      _
    $region11: #{tpu_custom_call.1} parent=1 // pred_check_branch
      %36 = sbr.rel (0) target = $region13
    $region12: #{tpu_custom_call.1} parent=1 // pred_region
      %s38 = ssub.s32 256, 256
      %39 = vsyncadd [#allocation4], %s38
      %s41 = sshll.u32 [#allocation5], 4
      %s42 = int_to_ptr.vmem [resolvable:$true] %s41
      %44 = dma.vmem_to_hbm [thread:$0]  %s42, 256, %s1, [#allocation4]
    $region13: #{tpu_custom_call.1} parent=1 // pred_fallthru
      _
    // Predicated region
    $region14: #{tpu_custom_call.1} parent=1 // pred_check
      _
    $region15: #{tpu_custom_call.1} parent=1 // pred_check_branch
      %46 = sbr.rel (0) target = $region17
    $region16: #{tpu_custom_call.1} parent=1 // pred_region
      %47 = dma.done [#allocation4], 256
    $region17: #{tpu_custom_call.1} parent=1 // pred_fallthru
      _
    %48 = vsyncpa [#allocation3], 1
    %49 = vsyncpa [#allocation4], 1

</llo_original>
